<compile_context>
chip_gen: v7x
topology: tpu7x:2x2x1
jax: 0.10.0
libtpu: 0.0.40
codegen_flags: <defaults>
</compile_context>

<pallas_src>
import math

import jax
import jax.numpy as jnp
from jax.experimental import pallas as pl
from jax.experimental.pallas import tpu as pltpu


def _round_up(x, m):
    return (x + m - 1) // m * m


_INV_SQRT2 = 1.0 / math.sqrt(2.0)

# Decoder switches to the "whole h resident in VMEM" variant when the estimated
# double-buffered working set stays under this budget (safe on v5e/v6e/v7x).
_RESIDENT_VMEM_BUDGET = 24 * 1024 * 1024
_DECODER_VMEM_LIMIT = 48 * 1024 * 1024


# ----------------------------------------------------------------------------
# Kernel 1: dense(H->H) + exact-erf gelu + LayerNorm(eps=1e-5), fused per
# token tile.  x/W1 are bf16, accumulation and the gelu/LN epilogue are f32,
# output is bf16 (consumed by the decoder).
# ----------------------------------------------------------------------------
def _transform_kernel(x_ref, w_ref, b_ref, gamma_ref, beta_ref, o_ref):
    h = jnp.dot(x_ref[...], w_ref[...], preferred_element_type=jnp.float32)
    h = h + b_ref[...]
    # gelu (erf formulation, matches the reference `gelu`)
    h = h * 0.5 * (1.0 + jax.lax.erf(h * jnp.float32(_INV_SQRT2)))
    # LayerNorm over the hidden axis, eps = 1e-5, biased variance.
    # (h - mean) computed once, reused for variance and normalization.
    mean = jnp.mean(h, axis=-1, keepdims=True)
    hm = h - mean
    var = jnp.mean(hm * hm, axis=-1, keepdims=True)
    hn = hm * jax.lax.rsqrt(var + 1e-5)
    o_ref[...] = (hn * gamma_ref[...] + beta_ref[...]).astype(o_ref.dtype)


# ----------------------------------------------------------------------------
# Kernel 2: decoder matmul (tokens x H) @ (H x V) + bias.  bf16 operands, f32
# accumulation, f32 logits.  Two grid layouts (chosen by the wrapper):
#   * resident-h : grid (V tiles,), whole h block held in VMEM  -> h DMA'd once.
#   * tiled      : grid (V tiles, token tiles), vocab OUTER / tokens INNER so
#                  each [H, tn] weight tile is streamed from HBM exactly once.
# ----------------------------------------------------------------------------
def _decoder_kernel(h_ref, wd_ref, bias_ref, o_ref):
    out = jnp.dot(h_ref[...], wd_ref[...], preferred_element_type=jnp.float32)
    o_ref[...] = (out + bias_ref[...]).astype(o_ref.dtype)


# ----------------------------------------------------------------------------
# One-time parameter preparation: bf16 casts + vocab padding, hoisted out of
# the per-forward path so the embedding matrix is never re-padded per call.
# ----------------------------------------------------------------------------
def prepare_heads_params(params, *, tn=2048):
    H, V = params["decoder_w"].shape
    tn_eff = min(tn, _round_up(V, 128))
    Vp = _round_up(V, tn_eff)

    wd = params["decoder_w"].astype(jnp.bfloat16)
    bd = params["decoder_b"].reshape(1, V).astype(jnp.float32)
    if Vp != V:
        wd = jnp.pad(wd, ((0, 0), (0, Vp - V)))
        bd = jnp.pad(bd, ((0, 0), (0, Vp - V)))

    return dict(
        H=H, V=V, Vp=Vp, tn=tn_eff,
        dense_w=params["dense_w"].astype(jnp.bfloat16),
        dense_b=params["dense_b"].reshape(1, H).astype(jnp.float32),
        ln_gamma=params["ln_gamma"].reshape(1, H).astype(jnp.float32),
        ln_beta=params["ln_beta"].reshape(1, H).astype(jnp.float32),
        decoder_w=wd,
        decoder_b=bd,
        seq_rel_w=params["seq_rel_w"].astype(jnp.float32),
        seq_rel_b=params["seq_rel_b"].astype(jnp.float32),
    )


def bert_pretraining_heads(sequence_output, pooled_output, prep, *, tm=256, tm_transform=512):
    """sequence_output [B,S,H], pooled_output [B,H] -> (logits [B,S,V], seq_rel [B,2])."""
    B, S, H = sequence_output.shape
    assert H == prep["H"]
    V, Vp, tn = prep["V"], prep["Vp"], prep["tn"]
    T = B * S

    # --- token tiling: decoder tile tm_d, transform tile tm_t (>= tm_d) ------
    tm_d = min(tm, _round_up(T, 8))
    Tp = _round_up(T, tm_d)
    tm_t = tm_transform if (Tp % tm_transform == 0) else tm_d

    x = sequence_output.reshape(T, H).astype(jnp.bfloat16)
    if Tp != T:
        x = jnp.pad(x, ((0, Tp - T), (0, 0)))

    # ---- transform: dense + gelu + layernorm (bf16 in / bf16 out) -----------
    transform = pl.pallas_call(
        _transform_kernel,
        out_shape=jax.ShapeDtypeStruct((Tp, H), jnp.bfloat16),
        grid_spec=pltpu.PrefetchScalarGridSpec(
            num_scalar_prefetch=0,
            grid=(Tp // tm_t,),
            in_specs=[
                pl.BlockSpec((tm_t, H), lambda i: (i, 0)),   # x tile (bf16)
                pl.BlockSpec((H, H), lambda i: (0, 0)),      # W1 (bf16, resident)
                pl.BlockSpec((1, H), lambda i: (0, 0)),      # b1 (f32)
                pl.BlockSpec((1, H), lambda i: (0, 0)),      # ln gamma (f32)
                pl.BlockSpec((1, H), lambda i: (0, 0)),      # ln beta (f32)
            ],
            out_specs=pl.BlockSpec((tm_t, H), lambda i: (i, 0)),
        ),
        compiler_params=pltpu.CompilerParams(
            dimension_semantics=("parallel",)),
    )
    h = transform(x, prep["dense_w"], prep["dense_b"], prep["ln_gamma"], prep["ln_beta"])

    # ---- decoder: h @ E^T + bias ---------------------------------------------
    # VMEM estimate (double-buffered) for the resident-h variant.
    resident_bytes = 2 * (Tp * H * 2 + H * tn * 2 + Tp * tn * 4 + tn * 4)
    resident_h = resident_bytes <= _RESIDENT_VMEM_BUDGET

    if resident_h:
        # Small-T path: whole h block resident; h read from HBM exactly once.
        decoder = pl.pallas_call(
            _decoder_kernel,
            out_shape=jax.ShapeDtypeStruct((Tp, Vp), jnp.float32),
            grid_spec=pltpu.PrefetchScalarGridSpec(
                num_scalar_prefetch=0,
                grid=(Vp // tn,),
                in_specs=[
                    pl.BlockSpec((Tp, H), lambda j: (0, 0)),   # whole h (bf16, resident)
                    pl.BlockSpec((H, tn), lambda j: (0, j)),   # E^T tile (bf16)
                    pl.BlockSpec((1, tn), lambda j: (0, j)),   # bias tile (f32)
                ],
                out_specs=pl.BlockSpec((Tp, tn), lambda j: (0, j)),
            ),
            compiler_params=pltpu.CompilerParams(
                dimension_semantics=("parallel",),
                vmem_limit_bytes=_DECODER_VMEM_LIMIT),
        )
    else:
        # General path: vocab OUTER, tokens INNER -> each weight tile DMA'd once.
        decoder = pl.pallas_call(
            _decoder_kernel,
            out_shape=jax.ShapeDtypeStruct((Tp, Vp), jnp.float32),
            grid_spec=pltpu.PrefetchScalarGridSpec(
                num_scalar_prefetch=0,
                grid=(Vp // tn, Tp // tm_d),
                in_specs=[
                    pl.BlockSpec((tm_d, H), lambda j, i: (i, 0)),   # h tile (bf16)
                    pl.BlockSpec((H, tn), lambda j, i: (0, j)),     # E^T tile (bf16, resident over i)
                    pl.BlockSpec((1, tn), lambda j, i: (0, j)),     # bias tile (f32)
                ],
                out_specs=pl.BlockSpec((tm_d, tn), lambda j, i: (i, j)),
            ),
            compiler_params=pltpu.CompilerParams(
                dimension_semantics=("parallel", "parallel"),
                vmem_limit_bytes=_DECODER_VMEM_LIMIT),
        )

    logits = decoder(h, prep["decoder_w"], prep["decoder_b"])
    prediction_scores = logits[:T, :V].reshape(B, S, V)

    # ---- seq_relationship head: tiny -> plain jnp (no kernel launch) --------
    seq_relationship_score = (
        pooled_output.astype(jnp.float32) @ prep["seq_rel_w"] + prep["seq_rel_b"]
    )

    return prediction_scores, seq_relationship_score


def _reference(sequence_output, pooled_output, params, *, mxu_dtype=jnp.float32):
    """Pure-JAX reference.  mxu_dtype=bf16 mirrors the kernel's MXU precision."""
    B, S, H = sequence_output.shape
    x = sequence_output.reshape(-1, H).astype(mxu_dtype)
    w1 = params["dense_w"].astype(mxu_dtype)
    h = jnp.dot(x, w1, preferred_element_type=jnp.float32) + params["dense_b"]
    h = h * 0.5 * (1.0 + jax.lax.erf(h / jnp.float32(math.sqrt(2.0))))
    mean = jnp.mean(h, axis=-1, keepdims=True)
    var = jnp.mean((h - mean) ** 2, axis=-1, keepdims=True)
    h = (h - mean) * jax.lax.rsqrt(var + 1e-5)
    h = (h * params["ln_gamma"] + params["ln_beta"]).astype(mxu_dtype)
    wd = params["decoder_w"].astype(mxu_dtype)
    pred = jnp.dot(h, wd, preferred_element_type=jnp.float32) + params["decoder_b"]
    pred = pred.reshape(B, S, -1)
    seq = pooled_output @ params["seq_rel_w"] + params["seq_rel_b"]
    return pred, seq


if __name__ == "__main__":
    # small BERT-like config; S and V deliberately NOT multiples of the tiles
    # to exercise the padding / tail-handling path.
    B, S, H, V = 2, 15, 256, 300

    key = jax.random.PRNGKey(0)
    k = jax.random.split(key, 8)

    # nn.Linear(hidden, hidden): torch weight is [out, in]; store transposed [in, out]
    dense_w = jax.random.normal(k[0], (H, H), jnp.float32) * 0.02
    dense_b = jax.random.normal(k[1], (H,), jnp.float32) * 0.02
    ln_gamma = jnp.ones((H,), jnp.float32)
    ln_beta = jnp.zeros((H,), jnp.float32)
    # bert_model_embedding_weights: [V, H]; decoder uses its transpose [H, V]
    embedding_weights = jax.random.normal(k[2], (V, H), jnp.float32) * 0.02
    decoder_w = embedding_weights.T
    decoder_b = jnp.zeros((V,), jnp.float32)      # self.bias init to zeros
    # nn.Linear(hidden, 2): store transposed [H, 2]
    seq_rel_w = jax.random.normal(k[4], (H, 2), jnp.float32) * 0.02
    seq_rel_b = jax.random.normal(k[5], (2,), jnp.float32) * 0.02

    params = dict(
        dense_w=dense_w, dense_b=dense_b,
        ln_gamma=ln_gamma, ln_beta=ln_beta,
        decoder_w=decoder_w, decoder_b=decoder_b,
        seq_rel_w=seq_rel_w, seq_rel_b=seq_rel_b,
    )

    sequence_output = jax.random.normal(k[3], (B, S, H), jnp.float32)
    pooled_output = jax.random.normal(k[6], (B, H), jnp.float32)

    # One-time param prep (bf16 casts + vocab padding), then the forward.
    prep = prepare_heads_params(params)
    pred, seq = bert_pretraining_heads(sequence_output, pooled_output, prep)
    pred = jax.block_until_ready(pred)
    seq = jax.block_until_ready(seq)

    # Tight check vs a reference using the same bf16-MXU / f32-accumulate path.
    ref_pred_bf16, ref_seq = _reference(
        sequence_output, pooled_output, params, mxu_dtype=jnp.bfloat16)
    # Loose sanity check vs the pure-f32 reference (bf16 path is an approximation).
    ref_pred_f32, _ = _reference(
        sequence_output, pooled_output, params, mxu_dtype=jnp.float32)

    assert pred.shape == (B, S, V)
    assert seq.shape == (B, 2)
    assert jnp.allclose(pred, ref_pred_bf16, atol=5e-3, rtol=5e-3)
    assert jnp.allclose(pred, ref_pred_f32, atol=5e-2, rtol=5e-2)
    assert jnp.allclose(seq, ref_seq, atol=1e-4, rtol=1e-4)

    print("KERNEL_OK")
</pallas_src>

<mosaic_0001>
module attributes {stable_mosaic.version = 11 : i64} {
  func.func @_transform_kernel(%arg0: i32, %arg1: memref<32x256xbf16, #tpu.memory_space<vmem>>, %arg2: memref<256x256xbf16, #tpu.memory_space<vmem>>, %arg3: memref<1x256xf32, #tpu.memory_space<vmem>>, %arg4: memref<1x256xf32, #tpu.memory_space<vmem>>, %arg5: memref<1x256xf32, #tpu.memory_space<vmem>>, %arg6: memref<32x256xbf16, #tpu.memory_space<vmem>>) attributes {dimension_semantics = [#tpu.dimension_semantics<parallel>], iteration_bounds = array<i64: 1>, scalar_prefetch = 0 : i64, scratch_operands = 0 : i64, tpu.core_type = #tpu.core_type<tc>, window_params = [{transform_indices = @transform_0, window_bounds = array<i64: 32, 256>}, {pipeline_mode = #tpu.pipeline_mode<synchronous>, transform_indices = @transform_1, window_bounds = array<i64: 256, 256>}, {pipeline_mode = #tpu.pipeline_mode<synchronous>, transform_indices = @transform_2, window_bounds = array<i64: 1, 256>}, {pipeline_mode = #tpu.pipeline_mode<synchronous>, transform_indices = @transform_3, window_bounds = array<i64: 1, 256>}, {pipeline_mode = #tpu.pipeline_mode<synchronous>, transform_indices = @transform_4, window_bounds = array<i64: 1, 256>}, {transform_indices = @transform_5, window_bounds = array<i64: 32, 256>}]} {
    %c0 = arith.constant 0 : index
    %c0_0 = arith.constant 0 : index
    %0 = vector.load %arg1[%c0, %c0_0] : memref<32x256xbf16, #tpu.memory_space<vmem>>, vector<32x256xbf16>
    %c0_1 = arith.constant 0 : index
    %c0_2 = arith.constant 0 : index
    %1 = vector.load %arg2[%c0_1, %c0_2] : memref<256x256xbf16, #tpu.memory_space<vmem>>, vector<256x256xbf16>
    %cst = arith.constant dense<0.000000e+00> : vector<32x256xf32>
    %2 = tpu.matmul %0, %1, %cst {dimension_numbers = #tpu.dot_dimension_numbers<[1], [0], [0], [1], [0, 0, 1, 1], [], []>} : vector<32x256xbf16>, vector<256x256xbf16>, vector<32x256xf32> -> vector<32x256xf32>
    %c0_3 = arith.constant 0 : index
    %c0_4 = arith.constant 0 : index
    %3 = vector.load %arg3[%c0_3, %c0_4] : memref<1x256xf32, #tpu.memory_space<vmem>>, vector<1x256xf32>
    %4 = vector.broadcast %3 : vector<1x256xf32> to vector<32x256xf32>
    %5 = arith.addf %2, %4 : vector<32x256xf32>
    %cst_5 = arith.constant 5.000000e-01 : f32
    %6 = vector.broadcast %cst_5 : f32 to vector<32x256xf32>
    %7 = arith.mulf %5, %6 : vector<32x256xf32>
    %cst_6 = arith.constant 0.707106769 : f32
    %8 = vector.broadcast %cst_6 : f32 to vector<32x256xf32>
    %9 = arith.mulf %5, %8 : vector<32x256xf32>
    %10 = math.erf %9 : vector<32x256xf32>
    %cst_7 = arith.constant 1.000000e+00 : f32
    %11 = vector.broadcast %cst_7 : f32 to vector<32x256xf32>
    %12 = arith.addf %11, %10 : vector<32x256xf32>
    %13 = arith.mulf %7, %12 : vector<32x256xf32>
    %cst_8 = arith.constant dense<0.000000e+00> : vector<32xf32>
    %14 = vector.multi_reduction <add>, %13, %cst_8 [1] : vector<32x256xf32> to vector<32xf32>
    %15 = vector.shape_cast %14 : vector<32xf32> to vector<32x1xf32>
    %cst_9 = arith.constant 2.560000e+02 : f32
    %16 = vector.broadcast %cst_9 : f32 to vector<32x1xf32>
    %17 = arith.divf %15, %16 : vector<32x1xf32>
    %18 = vector.broadcast %17 : vector<32x1xf32> to vector<32x256xf32>
    %19 = arith.subf %13, %18 : vector<32x256xf32>
    %20 = arith.mulf %19, %19 : vector<32x256xf32>
    %cst_10 = arith.constant dense<0.000000e+00> : vector<32xf32>
    %21 = vector.multi_reduction <add>, %20, %cst_10 [1] : vector<32x256xf32> to vector<32xf32>
    %22 = vector.shape_cast %21 : vector<32xf32> to vector<32x1xf32>
    %cst_11 = arith.constant 2.560000e+02 : f32
    %23 = vector.broadcast %cst_11 : f32 to vector<32x1xf32>
    %24 = arith.divf %22, %23 : vector<32x1xf32>
    %cst_12 = arith.constant 9.99999974E-6 : f32
    %25 = vector.broadcast %cst_12 : f32 to vector<32x1xf32>
    %26 = arith.addf %24, %25 : vector<32x1xf32>
    %27 = math.rsqrt %26 : vector<32x1xf32>
    %28 = vector.broadcast %27 : vector<32x1xf32> to vector<32x256xf32>
    %29 = arith.mulf %19, %28 : vector<32x256xf32>
    %c0_13 = arith.constant 0 : index
    %c0_14 = arith.constant 0 : index
    %30 = vector.load %arg4[%c0_13, %c0_14] : memref<1x256xf32, #tpu.memory_space<vmem>>, vector<1x256xf32>
    %31 = vector.broadcast %30 : vector<1x256xf32> to vector<32x256xf32>
    %32 = arith.mulf %29, %31 : vector<32x256xf32>
    %c0_15 = arith.constant 0 : index
    %c0_16 = arith.constant 0 : index
    %33 = vector.load %arg5[%c0_15, %c0_16] : memref<1x256xf32, #tpu.memory_space<vmem>>, vector<1x256xf32>
    %34 = vector.broadcast %33 : vector<1x256xf32> to vector<32x256xf32>
    %35 = arith.addf %32, %34 : vector<32x256xf32>
    %36 = arith.truncf %35 : vector<32x256xf32> to vector<32x256xbf16>
    %c0_17 = arith.constant 0 : index
    %c0_18 = arith.constant 0 : index
    %37 = vector.load %arg6[%c0_17, %c0_18] : memref<32x256xbf16, #tpu.memory_space<vmem>>, vector<32x256xbf16>
    tpu.vector_store %arg6[%c0_17, %c0_18], %36 {strides = array<i32>} : memref<32x256xbf16, #tpu.memory_space<vmem>>, vector<32x256xbf16>,
    return
  }
  func.func @transform_0(%arg0: i32) -> (i32, i32) {
    %c0_i32 = arith.constant 0 : i32
    %c0_i32_0 = arith.constant 0 : i32
    return %arg0, %c0_i32 : i32, i32
  }
  func.func @transform_1(%arg0: i32) -> (i32, i32) {
    %c0_i32 = arith.constant 0 : i32
    %c0_i32_0 = arith.constant 0 : i32
    %c0_i32_1 = arith.constant 0 : i32
    return %c0_i32, %c0_i32_0 : i32, i32
  }
  func.func @transform_2(%arg0: i32) -> (i32, i32) {
    %c0_i32 = arith.constant 0 : i32
    %c0_i32_0 = arith.constant 0 : i32
    %c0_i32_1 = arith.constant 0 : i32
    return %c0_i32, %c0_i32_0 : i32, i32
  }
  func.func @transform_3(%arg0: i32) -> (i32, i32) {
    %c0_i32 = arith.constant 0 : i32
    %c0_i32_0 = arith.constant 0 : i32
    %c0_i32_1 = arith.constant 0 : i32
    return %c0_i32, %c0_i32_0 : i32, i32
  }
  func.func @transform_4(%arg0: i32) -> (i32, i32) {
    %c0_i32 = arith.constant 0 : i32
    %c0_i32_0 = arith.constant 0 : i32
    %c0_i32_1 = arith.constant 0 : i32
    return %c0_i32, %c0_i32_0 : i32, i32
  }
  func.func @transform_5(%arg0: i32) -> (i32, i32) {
    %c0_i32 = arith.constant 0 : i32
    %c0_i32_0 = arith.constant 0 : i32
    return %arg0, %c0_i32 : i32, i32
  }
}

</mosaic_0001>

<llo_original>
// kernel: tpu_custom_call.1
$region0: #{tpu_custom_call.1}
  #allocation0 [shape = 'u32[]', space=smem, size = 0x4, offset = 0x4, fixed_abs, tag = 'smem constant byte address 0x4 - core index']
  #allocation1 [shape = 'u32[144,128]{1,0:T(1,128)}', space=vmem, size = 0x12000, scoped, tag = 'internal scratch']
  %s0 = inlined_call_operand.hbm [shape: bf16[32,256], index: 0, kind: input, shape index: {}]
  %s1 = inlined_call_operand.hbm [shape: bf16[256,256], index: 1, kind: input, shape index: {}]
  %s2 = inlined_call_operand.vmem [shape: f32[1,256], index: 2, kind: input, shape index: {}]
  %s3 = inlined_call_operand.vmem [shape: f32[1,256], index: 3, kind: input, shape index: {}]
  %s4 = inlined_call_operand.vmem [shape: f32[1,256], index: 4, kind: input, shape index: {}]
  %s5 = inlined_call_operand.hbm [shape: bf16[32,256], index: 5, kind: output, shape index: {}]
  %s6 = sld [smem:[#allocation0]]
  $region38: #{tpu_custom_call.1} parent=0
    _
  %s8 = ssub.s32 1, %s6
  %s9 = scalar_select 0, %s8, %s6
  $region1: #{tpu_custom_call.1} parent=0
    #allocation2 [shape = 'u8[16384]{0}', space=vmem, size = 0x4000, scoped, tag = 'input window, operand 0, single buffered']
    #allocation3 [shape = 's32[1]{0}', space=sflag, size = 0x4, scoped, tag = 'scoped memory for tpu_custom_call.1']
    #allocation4 [shape = 's32[1]{0}', space=sflag, size = 0x4, scoped, tag = 'scoped memory for tpu_custom_call.1']
    #allocation5 [shape = 'u8[131072]{0}', space=vmem, size = 0x20000, scoped, tag = 'input window, operand 1, single buffered']
    #allocation6 [shape = 's32[1]{0}', space=sflag, size = 0x4, scoped, tag = 'scoped memory for tpu_custom_call.1']
    #allocation7 [shape = 'u8[16384]{0}', space=vmem, size = 0x4000, scoped, tag = 'output window, operand 0, single buffered']
    %10 = vsyncpa [#allocation3], 0
    %11 = vsyncpa [#allocation6], 0
    %12 = vsyncpa [#allocation4], 0
    // Predicated region
    $region2: #{tpu_custom_call.1} parent=1 // pred_check
      _
    $region3: #{tpu_custom_call.1} parent=1 // pred_check_branch
      %14 = sbr.rel (0) target = $region5
    $region4: #{tpu_custom_call.1} parent=1 // pred_region
      %s16 = ssub.s32 512, 512
      %17 = vsyncadd [#allocation3], %s16
      %s18 = sshll.u32 [#allocation2], 4
      %s19 = int_to_ptr.vmem [resolvable:$true] %s18
      %24 = dma.hbm_to_vmem [thread:$0]  %s0, 512, %s19, [#allocation3], 128, 128, 8
    $region5: #{tpu_custom_call.1} parent=1 // pred_fallthru
      _
    // Predicated region
    $region6: #{tpu_custom_call.1} parent=1 // pred_check
      _
    $region7: #{tpu_custom_call.1} parent=1 // pred_check_branch
      %26 = sbr.rel (0) target = $region9
    $region8: #{tpu_custom_call.1} parent=1 // pred_region
      %s28 = ssub.s32 4096, 4096
      %29 = vsyncadd [#allocation6], %s28
      %s30 = sshll.u32 [#allocation5], 4
      %s31 = int_to_ptr.vmem [resolvable:$true] %s30
      %36 = dma.hbm_to_vmem [thread:$0]  %s1, 4096, %s31, [#allocation6], 128, 128, 8
    $region9: #{tpu_custom_call.1} parent=1 // pred_fallthru
      _
    // Predicated region
    $region10: #{tpu_custom_call.1} parent=1 // pred_check
      _
    $region11: #{tpu_custom_call.1} parent=1 // pred_check_branch
      %38 = sbr.rel (0) target = $region13
    $region12: #{tpu_custom_call.1} parent=1 // pred_region
      _
    $region13: #{tpu_custom_call.1} parent=1 // pred_fallthru
      _
    // Predicated region
    $region14: #{tpu_custom_call.1} parent=1 // pred_check
      _
    $region15: #{tpu_custom_call.1} parent=1 // pred_check_branch
      %40 = sbr.rel (0) target = $region17
    $region16: #{tpu_custom_call.1} parent=1 // pred_region
      _
    $region17: #{tpu_custom_call.1} parent=1 // pred_fallthru
      _
    // Predicated region
    $region18: #{tpu_custom_call.1} parent=1 // pred_check
      _
    $region19: #{tpu_custom_call.1} parent=1 // pred_check_branch
      %42 = sbr.rel (0) target = $region21
    $region20: #{tpu_custom_call.1} parent=1 // pred_region
      _
    $region21: #{tpu_custom_call.1} parent=1 // pred_fallthru
      _
    // Predicated region
    $region22: #{tpu_custom_call.1} parent=1 // pred_check
      _
    $region23: #{tpu_custom_call.1} parent=1 // pred_check_branch
      %44 = sbr.rel (0) target = $region25
    $region24: #{tpu_custom_call.1} parent=1 // pred_region
      %45 = dma.done [#allocation3], 512
    $region25: #{tpu_custom_call.1} parent=1 // pred_fallthru
      _
    // Predicated region
    $region26: #{tpu_custom_call.1} parent=1 // pred_check
      _
    $region27: #{tpu_custom_call.1} parent=1 // pred_check_branch
      %47 = sbr.rel (0) target = $region29
    $region28: #{tpu_custom_call.1} parent=1 // pred_region
      %48 = dma.done [#allocation6], 4096
    $region29: #{tpu_custom_call.1} parent=1 // pred_fallthru
      _
    %v49 = vld [vmem:[#allocation2] sm:$0xff]
    %v50 = vld [vmem:[#allocation2 + $0x8] sm:$0xff]
    %v51 = vld [vmem:[#allocation2 + $0x10] sm:$0xff]
    %v52 = vld [vmem:[#allocation2 + $0x18] sm:$0xff]
    %v53 = vld [vmem:[#allocation5] sm:$0xff]
    %v54 = vld [vmem:[#allocation5 + $0x8] sm:$0xff]
    %v55 = vld [vmem:[#allocation5 + $0x10] sm:$0xff]
    %v56 = vld [vmem:[#allocation5 + $0x18] sm:$0xff]
    %v57 = vld [vmem:[#allocation5 + $0x20] sm:$0xff]
    %v58 = vld [vmem:[#allocation5 + $0x28] sm:$0xff]
    %v59 = vld [vmem:[#allocation5 + $0x30] sm:$0xff]
    %v60 = vld [vmem:[#allocation5 + $0x38] sm:$0xff]
    %v61 = vld [vmem:[#allocation5 + $0x40] sm:$0xff]
    %v62 = vld [vmem:[#allocation5 + $0x48] sm:$0xff]
    %v63 = vld [vmem:[#allocation5 + $0x50] sm:$0xff]
    %v64 = vld [vmem:[#allocation5 + $0x58] sm:$0xff]
    %v65 = vld [vmem:[#allocation5 + $0x60] sm:$0xff]
    %v66 = vld [vmem:[#allocation5 + $0x68] sm:$0xff]
    %v67 = vld [vmem:[#allocation5 + $0x70] sm:$0xff]
    %v68 = vld [vmem:[#allocation5 + $0x78] sm:$0xff]
    %v69 = vld [vmem:[#allocation5 + $0x80] sm:$0xff]
    %v70 = vld [vmem:[#allocation5 + $0x88] sm:$0xff]
    %v71 = vld [vmem:[#allocation5 + $0x90] sm:$0xff]
    %v72 = vld [vmem:[#allocation5 + $0x98] sm:$0xff]
    %v73 = vld [vmem:[#allocation5 + $0xa0] sm:$0xff]
    %v74 = vld [vmem:[#allocation5 + $0xa8] sm:$0xff]
    %v75 = vld [vmem:[#allocation5 + $0xb0] sm:$0xff]
    %v76 = vld [vmem:[#allocation5 + $0xb8] sm:$0xff]
    %v77 = vld [vmem:[#allocation5 + $0xc0] sm:$0xff]
    %v78 = vld [vmem:[#allocation5 + $0xc8] sm:$0xff]
    %v79 = vld [vmem:[#allocation5 + $0xd0] sm:$0xff]
    %v80 = vld [vmem:[#allocation5 + $0xd8] sm:$0xff]
    %v81 = vld [vmem:[#allocation5 + $0xe0] sm:$0xff]
    %v82 = vld [vmem:[#allocation5 + $0xe8] sm:$0xff]
    %v83 = vld [vmem:[#allocation5 + $0xf0] sm:$0xff]
    %v84 = vld [vmem:[#allocation5 + $0xf8] sm:$0xff]
    %v85 = vld [vmem:[%s2] sm:$0x3]
    %v87 = vlaneseq
    %v88 = vshrl.u32 %v87, 7
    %v89 = vsub.s32 0, %v88
    %v90 = vrot.slane %v85, %v89
    %v91 = vlaneseq
    %v92 = vshrl.u32 %v91, 7
    %v93 = vsub.s32 1, %v92
    %v94 = vrot.slane %v85, %v93
    %v101 = vunpack.c.l.b16 %v49
    %v102 = vunpack.c.h.b16 %v49
    %v103 = vunpack.c.l.b16 %v50
    %v104 = vunpack.c.h.b16 %v50
    %v105 = vunpack.c.l.b16 %v51
    %v106 = vunpack.c.h.b16 %v51
    %v107 = vunpack.c.l.b16 %v52
    %v108 = vunpack.c.h.b16 %v52
    %v109 = vpack.c.b16 %v103, %v101
    %v110 = vpack.c.b16 %v104, %v102
    %v111 = vpack.c.b16 %v107, %v105
    %v112 = vpack.c.b16 %v108, %v106
    %v149 = vunpack.c.l.b16 %v53
    %v150 = vunpack.c.h.b16 %v53
    %v151 = vunpack.c.l.b16 %v54
    %v152 = vunpack.c.h.b16 %v54
    %v153 = vunpack.c.l.b16 %v55
    %v154 = vunpack.c.h.b16 %v55
    %v155 = vunpack.c.l.b16 %v56
    %v156 = vunpack.c.h.b16 %v56
    %v157 = vunpack.c.l.b16 %v57
    %v158 = vunpack.c.h.b16 %v57
    %v159 = vunpack.c.l.b16 %v58
    %v160 = vunpack.c.h.b16 %v58
    %v161 = vunpack.c.l.b16 %v59
    %v162 = vunpack.c.h.b16 %v59
    %v163 = vunpack.c.l.b16 %v60
    %v164 = vunpack.c.h.b16 %v60
    %v165 = vunpack.c.l.b16 %v61
    %v166 = vunpack.c.h.b16 %v61
    %v167 = vunpack.c.l.b16 %v62
    %v168 = vunpack.c.h.b16 %v62
    %v169 = vunpack.c.l.b16 %v63
    %v170 = vunpack.c.h.b16 %v63
    %v171 = vunpack.c.l.b16 %v64
    %v172 = vunpack.c.h.b16 %v64
    %v173 = vunpack.c.l.b16 %v65
    %v174 = vunpack.c.h.b16 %v65
    %v175 = vunpack.c.l.b16 %v66
    %v176 = vunpack.c.h.b16 %v66
    %v177 = vunpack.c.l.b16 %v67
    %v178 = vunpack.c.h.b16 %v67
    %v179 = vunpack.c.l.b16 %v68
    %v180 = vunpack.c.h.b16 %v68
    %v181 = vunpack.c.l.b16 %v69
    %v182 = vunpack.c.h.b16 %v69
    %v183 = vunpack.c.l.b16 %v70
    %v184 = vunpack.c.h.b16 %v70
    %v185 = vunpack.c.l.b16 %v71
    %v186 = vunpack.c.h.b16 %v71
    %v187 = vunpack.c.l.b16 %v72
    %v188 = vunpack.c.h.b16 %v72
    %v189 = vunpack.c.l.b16 %v73
    %v190 = vunpack.c.h.b16 %v73
    %v191 = vunpack.c.l.b16 %v74
    %v192 = vunpack.c.h.b16 %v74
    %v193 = vunpack.c.l.b16 %v75
    %v194 = vunpack.c.h.b16 %v75
    %v195 = vunpack.c.l.b16 %v76
    %v196 = vunpack.c.h.b16 %v76
    %v197 = vunpack.c.l.b16 %v77
    %v198 = vunpack.c.h.b16 %v77
    %v199 = vunpack.c.l.b16 %v78
    %v200 = vunpack.c.h.b16 %v78
    %v201 = vunpack.c.l.b16 %v79
    %v202 = vunpack.c.h.b16 %v79
    %v203 = vunpack.c.l.b16 %v80
    %v204 = vunpack.c.h.b16 %v80
    %v205 = vunpack.c.l.b16 %v81
    %v206 = vunpack.c.h.b16 %v81
    %v207 = vunpack.c.l.b16 %v82
    %v208 = vunpack.c.h.b16 %v82
    %v209 = vunpack.c.l.b16 %v83
    %v210 = vunpack.c.h.b16 %v83
    %v211 = vunpack.c.l.b16 %v84
    %v212 = vunpack.c.h.b16 %v84
    %v213 = vpack.c.b16 %v151, %v149
    %v214 = vpack.c.b16 %v152, %v150
    %v215 = vpack.c.b16 %v155, %v153
    %v216 = vpack.c.b16 %v156, %v154
    %v217 = vpack.c.b16 %v159, %v157
    %v218 = vpack.c.b16 %v160, %v158
    %v219 = vpack.c.b16 %v163, %v161
    %v220 = vpack.c.b16 %v164, %v162
    %v221 = vpack.c.b16 %v167, %v165
    %v222 = vpack.c.b16 %v168, %v166
    %v223 = vpack.c.b16 %v171, %v169
    %v224 = vpack.c.b16 %v172, %v170
    %v225 = vpack.c.b16 %v175, %v173
    %v226 = vpack.c.b16 %v176, %v174
    %v227 = vpack.c.b16 %v179, %v177
    %v228 = vpack.c.b16 %v180, %v178
    %v229 = vpack.c.b16 %v183, %v181
    %v230 = vpack.c.b16 %v184, %v182
    %v231 = vpack.c.b16 %v187, %v185
    %v232 = vpack.c.b16 %v188, %v186
    %v233 = vpack.c.b16 %v191, %v189
    %v234 = vpack.c.b16 %v192, %v190
    %v235 = vpack.c.b16 %v195, %v193
    %v236 = vpack.c.b16 %v196, %v194
    %v237 = vpack.c.b16 %v199, %v197
    %v238 = vpack.c.b16 %v200, %v198
    %v239 = vpack.c.b16 %v203, %v201
    %v240 = vpack.c.b16 %v204, %v202
    %v241 = vpack.c.b16 %v207, %v205
    %v242 = vpack.c.b16 %v208, %v206
    %v243 = vpack.c.b16 %v211, %v209
    %v244 = vpack.c.b16 %v212, %v210
    %277 = vmatprep.subr.bf16.mxu0 %v214
    %278 = vmatpush1.bf16.msra.mxu0 %v213
    %279 = vmatprep.subr.bf16.mxu0 %v216
    %280 = vmatpush1.bf16.msra.mxu0 %v215
    %281 = vmatprep.subr.bf16.mxu0 %v218
    %282 = vmatpush1.bf16.msra.mxu0 %v217
    %283 = vmatprep.subr.bf16.mxu0 %v220
    %284 = vmatpush1.bf16.msra.mxu0 %v219
    %285 = vmatprep.subr.bf16.mxu0 %v222
    %286 = vmatpush1.bf16.msra.mxu0 %v221
    %287 = vmatprep.subr.bf16.mxu0 %v224
    %288 = vmatpush1.bf16.msra.mxu0 %v223
    %289 = vmatprep.subr.bf16.mxu0 %v226
    %290 = vmatpush1.bf16.msra.mxu0 %v225
    %291 = vmatprep.subr.bf16.mxu0 %v228
    %292 = vmatpush1.bf16.msra.mxu0 %v227
    %293 = vmatprep.subr.bf16.mxu0 %v230
    %294 = vmatpush1.bf16.msra.mxu0 %v229
    %295 = vmatprep.subr.bf16.mxu0 %v232
    %296 = vmatpush1.bf16.msra.mxu0 %v231
    %297 = vmatprep.subr.bf16.mxu0 %v234
    %298 = vmatpush1.bf16.msra.mxu0 %v233
    %299 = vmatprep.subr.bf16.mxu0 %v236
    %300 = vmatpush1.bf16.msra.mxu0 %v235
    %301 = vmatprep.subr.bf16.mxu0 %v238
    %302 = vmatpush1.bf16.msra.mxu0 %v237
    %303 = vmatprep.subr.bf16.mxu0 %v240
    %304 = vmatpush1.bf16.msra.mxu0 %v239
    %305 = vmatprep.subr.bf16.mxu0 %v242
    %306 = vmatpush1.bf16.msra.mxu0 %v241
    %307 = vmatprep.subr.bf16.mxu0 %v244
    %308 = vmatpush1.bf16.msra.mxu0 %v243
    %309 = vmatprep.mubr.bf16.mxu0 %v110
    %310 = vmatmul.mubr.bf16.gmra.mrb[0].mxu0 %v109
    %v311 = vpop.f32.mrb[0].mxu0
    %v312 = vadd.f32 %v90, %v311
    %v313 = vpop.f32.mrb[0].mxu0
    %v314 = vadd.f32 %v94, %v313
    %v315 = vpop.f32.mrb[0].mxu0
    %v316 = vadd.f32 %v90, %v315
    %v317 = vpop.f32.mrb[0].mxu0
    %v318 = vadd.f32 %v94, %v317
    %319 = vmatprep.mubr.bf16.mxu0 %v112
    %320 = vmatmul.mubr.bf16.gmra.mrb[0].mxu0 %v111
    %v321 = vpop.f32.mrb[0].mxu0
    %v322 = vadd.f32 %v90, %v321
    %v323 = vpop.f32.mrb[0].mxu0
    %v324 = vadd.f32 %v94, %v323
    %v325 = vpop.f32.mrb[0].mxu0
    %v326 = vadd.f32 %v90, %v325
    %v327 = vpop.f32.mrb[0].mxu0
    %v328 = vadd.f32 %v94, %v327
    %329 = vdwg.mxu0
    %v330 = vmul.f32 %v312, 0.5
    %v331 = vmul.f32 %v314, 0.5
    %v332 = vmul.f32 %v316, 0.5
    %v333 = vmul.f32 %v318, 0.5
    %v334 = vmul.f32 %v322, 0.5
    %v335 = vmul.f32 %v324, 0.5
    %v336 = vmul.f32 %v326, 0.5
    %v337 = vmul.f32 %v328, 0.5
    %v338 = vmul.f32 %v312, 0.70710677
    %v339 = vmul.f32 %v314, 0.70710677
    %v340 = vmul.f32 %v316, 0.70710677
    %v341 = vmul.f32 %v318, 0.70710677
    %v342 = vmul.f32 %v322, 0.70710677
    %v343 = vmul.f32 %v324, 0.70710677
    %v344 = vmul.f32 %v326, 0.70710677
    %v345 = vmul.f32 %v328, 0.70710677
    %v346 = verf.f32.pop %v338
    %v347 = verf.f32.pop %v339
    %v348 = verf.f32.pop %v340
    %v349 = verf.f32.pop %v341
    %v350 = verf.f32.pop %v342
    %v351 = verf.f32.pop %v343
    %v352 = verf.f32.pop %v344
    %v353 = verf.f32.pop %v345
    %v354 = vadd.f32 %v346, 1.0
    %v355 = vadd.f32 %v347, 1.0
    %v356 = vadd.f32 %v348, 1.0
    %v357 = vadd.f32 %v349, 1.0
    %v358 = vadd.f32 %v350, 1.0
    %v359 = vadd.f32 %v351, 1.0
    %v360 = vadd.f32 %v352, 1.0
    %v361 = vadd.f32 %v353, 1.0
    %v362 = vmul.f32 %v330, %v354
    %v363 = vmul.f32 %v331, %v355
    %v364 = vmul.f32 %v332, %v356
    %v365 = vmul.f32 %v333, %v357
    %v366 = vmul.f32 %v334, %v358
    %v367 = vmul.f32 %v335, %v359
    %v368 = vmul.f32 %v336, %v360
    %v369 = vmul.f32 %v337, %v361
    %v370 = vadd.f32 %v362, %v363
    %371 = vadd.xlane.f32.xlu0 %v370
    %v372 = vpop.xlane.xlu0 %371
    %v373 = vadd.f32 %v364, %v365
    %374 = vadd.xlane.f32.xlu0 %v373
    %v375 = vpop.xlane.xlu0 %374
    %v376 = vadd.f32 %v366, %v367
    %377 = vadd.xlane.f32.xlu0 %v376
    %v378 = vpop.xlane.xlu0 %377
    %v379 = vadd.f32 %v368, %v369
    %380 = vadd.xlane.f32.xlu0 %v379
    %v381 = vpop.xlane.xlu0 %380
    %v382 = vrcp.pop 256.0
    %v383 = vmul.f32 %v372, %v382
    %v384 = vmul.f32 %v375, %v382
    %v385 = vmul.f32 %v378, %v382
    %v386 = vmul.f32 %v381, %v382
    %v387 = vsub.f32 %v362, %v383
    %v388 = vsub.f32 %v363, %v383
    %v389 = vsub.f32 %v364, %v384
    %v390 = vsub.f32 %v365, %v384
    %v391 = vsub.f32 %v366, %v385
    %v392 = vsub.f32 %v367, %v385
    %v393 = vsub.f32 %v368, %v386
    %v394 = vsub.f32 %v369, %v386
    %v395 = vmul.f32 %v387, %v387
    %v396 = vmul.f32 %v388, %v388
    %v397 = vmul.f32 %v389, %v389
    %v398 = vmul.f32 %v390, %v390
    %v399 = vmul.f32 %v391, %v391
    %v400 = vmul.f32 %v392, %v392
    %v401 = vmul.f32 %v393, %v393
    %v402 = vmul.f32 %v394, %v394
    %v403 = vadd.f32 %v395, %v396
    %404 = vadd.xlane.f32.xlu0 %v403
    %v405 = vpop.xlane.xlu0 %404
    %v406 = vadd.f32 %v397, %v398
    %407 = vadd.xlane.f32.xlu0 %v406
    %v408 = vpop.xlane.xlu0 %407
    %v409 = vadd.f32 %v399, %v400
    %410 = vadd.xlane.f32.xlu0 %v409
    %v411 = vpop.xlane.xlu0 %410
    %v412 = vadd.f32 %v401, %v402
    %413 = vadd.xlane.f32.xlu0 %v412
    %v414 = vpop.xlane.xlu0 %413
    %v415 = vmul.f32 %v405, %v382
    %v416 = vmul.f32 %v408, %v382
    %v417 = vmul.f32 %v411, %v382
    %v418 = vmul.f32 %v414, %v382
    %v419 = vadd.f32 %v415, 1e-05
    %v420 = vadd.f32 %v416, 1e-05
    %v421 = vadd.f32 %v417, 1e-05
    %v422 = vadd.f32 %v418, 1e-05
    %v423 = vrsqrt.pop %v419
    %v424 = vrsqrt.pop %v420
    %v425 = vrsqrt.pop %v421
    %v426 = vrsqrt.pop %v422
    %v427 = vmul.f32 %v387, %v423
    %v428 = vmul.f32 %v388, %v423
    %v429 = vmul.f32 %v389, %v424
    %v430 = vmul.f32 %v390, %v424
    %v431 = vmul.f32 %v391, %v425
    %v432 = vmul.f32 %v392, %v425
    %v433 = vmul.f32 %v393, %v426
    %v434 = vmul.f32 %v394, %v426
    %v435 = vld [vmem:[%s3] sm:$0x3]
    %v437 = vlaneseq
    %v438 = vshrl.u32 %v437, 7
    %v439 = vsub.s32 0, %v438
    %v440 = vrot.slane %v435, %v439
    %v441 = vlaneseq
    %v442 = vshrl.u32 %v441, 7
    %v443 = vsub.s32 1, %v442
    %v444 = vrot.slane %v435, %v443
    %v447 = vmul.f32 %v427, %v440
    %v448 = vmul.f32 %v428, %v444
    %v449 = vmul.f32 %v429, %v440
    %v450 = vmul.f32 %v430, %v444
    %v451 = vmul.f32 %v431, %v440
    %v452 = vmul.f32 %v432, %v444
    %v453 = vmul.f32 %v433, %v440
    %v454 = vmul.f32 %v434, %v444
    %v455 = vld [vmem:[%s4] sm:$0x3]
    %v457 = vlaneseq
    %v458 = vshrl.u32 %v457, 7
    %v459 = vsub.s32 0, %v458
    %v460 = vrot.slane %v455, %v459
    %v461 = vlaneseq
    %v462 = vshrl.u32 %v461, 7
    %v463 = vsub.s32 1, %v462
    %v464 = vrot.slane %v455, %v463
    %v467 = vadd.f32 %v447, %v460
    %v468 = vadd.f32 %v448, %v464
    %v469 = vadd.f32 %v449, %v460
    %v470 = vadd.f32 %v450, %v464
    %v471 = vadd.f32 %v451, %v460
    %v472 = vadd.f32 %v452, %v464
    %v473 = vadd.f32 %v453, %v460
    %v474 = vadd.f32 %v454, %v464
    %v475 = vpack.c.bf16 %v469, %v467
    %v476 = vpack.c.bf16 %v470, %v468
    %v477 = vpack.c.bf16 %v473, %v471
    %v478 = vpack.c.bf16 %v474, %v472
    %v483 = vunpack.c.l.b16 %v475
    %v484 = vunpack.c.l.b16 %v476
    %v485 = vunpack.c.h.b16 %v475
    %v486 = vunpack.c.h.b16 %v476
    %v487 = vunpack.c.l.b16 %v477
    %v488 = vunpack.c.l.b16 %v478
    %v489 = vunpack.c.h.b16 %v477
    %v490 = vunpack.c.h.b16 %v478
    %v491 = vpack.c.b16 %v484, %v483
    %v492 = vpack.c.b16 %v486, %v485
    %v493 = vpack.c.b16 %v488, %v487
    %v494 = vpack.c.b16 %v490, %v489
    %499 = vst [vmem:[#allocation7] sm:$0xff] %v491
    %500 = vst [vmem:[#allocation7 + $0x8] sm:$0xff] %v492
    %501 = vst [vmem:[#allocation7 + $0x10] sm:$0xff] %v493
    %502 = vst [vmem:[#allocation7 + $0x18] sm:$0xff] %v494
    // Predicated region
    $region30: #{tpu_custom_call.1} parent=1 // pred_check
      _
    $region31: #{tpu_custom_call.1} parent=1 // pred_check_branch
      %504 = sbr.rel (0) target = $region33
    $region32: #{tpu_custom_call.1} parent=1 // pred_region
      %s506 = ssub.s32 512, 512
      %507 = vsyncadd [#allocation4], %s506
      %s508 = sshll.u32 [#allocation7], 4
      %s509 = int_to_ptr.vmem [resolvable:$true] %s508
      %514 = dma.vmem_to_hbm [thread:$0]  %s509, 512, %s5, [#allocation4], 128, 128, 8
    $region33: #{tpu_custom_call.1} parent=1 // pred_fallthru
      _
    // Predicated region
    $region34: #{tpu_custom_call.1} parent=1 // pred_check
      _
    $region35: #{tpu_custom_call.1} parent=1 // pred_check_branch
      %516 = sbr.rel (0) target = $region37
    $region36: #{tpu_custom_call.1} parent=1 // pred_region
      %517 = dma.done [#allocation4], 512
    $region37: #{tpu_custom_call.1} parent=1 // pred_fallthru
      _
    %518 = vsyncpa [#allocation3], 1
    %519 = vsyncpa [#allocation6], 1
    %520 = vsyncpa [#allocation4], 1

</llo_original>
